<compile_context>
chip_gen: v7x
topology: tpu7x:2x2x1
jax: 0.10.0
libtpu: 0.0.40
codegen_flags: <defaults>
</compile_context>

<pallas_src>
import jax
import jax.numpy as jnp
from jax.experimental import pallas as pl
from jax.experimental.pallas import tpu as pltpu

_LANES = 128


def _sublane_multiple(dtype) -> int:
    """Minimum sublane alignment for a dtype (sub-32-bit packs along sublanes)."""
    itemsize = jnp.dtype(dtype).itemsize
    if itemsize >= 4:
        return 8
    if itemsize == 2:
        return 16
    return 32  # int8 / fp8


def _swish_kernel(x_ref, o_ref):
    xf = x_ref[...].astype(jnp.float32)
    # swish(x) = x * sigmoid(x), with sigmoid(x) = 0.5 * tanh(0.5 * x) + 0.5.
    # One EUP op per element; accurate to a few f32 ULP of the exact sigmoid.
    o_ref[...] = (xf * (0.5 * jnp.tanh(0.5 * xf) + 0.5)).astype(o_ref.dtype)


def swish(x, *, tile_rows=8192):
    """Elementwise Swish on an arbitrarily-shaped array (matches input shape/dtype)."""
    orig_shape = x.shape
    orig_dtype = x.dtype
    n = x.size
    if n == 0:
        return x

    sub = _sublane_multiple(orig_dtype)

    # Lane-dense [rows, 128] slab; rows padded only to the dtype's sublane
    # multiple (NOT up to the tile) — Pallas masks the partial last block, so
    # any element count that is a multiple of sub*128 takes the zero-copy path.
    rows = pl.cdiv(n, _LANES)
    rows_padded = pl.cdiv(rows, sub) * sub
    padded_n = rows_padded * _LANES

    # Block row count: large by default (8192 rows = 4 MiB f32 / 2 MiB bf16),
    # clamped to the slab, always a multiple of the sublane alignment.
    tile = max(sub, (min(tile_rows, rows_padded) // sub) * sub)
    num_blocks = pl.cdiv(rows_padded, tile)

    # v7x has 2 TensorCores: once there's enough work to split, force an even
    # number (>= 2) of grid steps so "parallel" sharding gives both cores equal
    # work. No effect on single-TC v5e/v6e beyond slightly smaller blocks.
    if rows_padded > 512 and num_blocks % 2 == 1:
        num_blocks += 1
        tile = pl.cdiv(pl.cdiv(rows_padded, num_blocks), sub) * sub
        num_blocks = pl.cdiv(rows_padded, tile)

    flat = jnp.reshape(x, (-1,))
    if padded_n != n:
        # Only truly ragged sizes pay a pad + slice; swish(0) == 0 so the pad
        # region is harmless and sliced off below.
        flat = jnp.pad(flat, (0, padded_n - n))
    slab = jnp.reshape(flat, (rows_padded, _LANES))

    out = pl.pallas_call(
        _swish_kernel,
        out_shape=jax.ShapeDtypeStruct((rows_padded, _LANES), orig_dtype),
        grid=(num_blocks,),
        in_specs=[pl.BlockSpec((tile, _LANES), lambda i: (i, 0))],
        out_specs=pl.BlockSpec((tile, _LANES), lambda i: (i, 0)),
        compiler_params=pltpu.CompilerParams(
            dimension_semantics=("parallel",),
            # 2 arrays x 2 (double-buffer) x 4 MiB f32 block = 16 MiB; 48 MiB
            # gives headroom and stays under v7x's 64 MiB physical VMEM
            # (v5e/v6e have 128 MiB, so this is safe everywhere).
            vmem_limit_bytes=48 * 1024 * 1024,
        ),
        # TODO(synk): with donated inputs, input_output_aliases={0: 0} would
        # mirror the PyTorch in-place semantics and halve peak HBM footprint;
        # left off because un-donated callers would pay a defensive copy.
    )(slab)

    if padded_n != n:
        out = jnp.reshape(out, (-1,))[:n]
    return jnp.reshape(out, orig_shape)


if __name__ == "__main__":
    key = jax.random.PRNGKey(0)
    k0, k1, k2, k3 = jax.random.split(key, 4)

    # NCHW input, matching the PyTorch module's typical usage (f32, aligned).
    x = jax.random.normal(k0, (2, 4, 16, 16), dtype=jnp.float32)
    y = jax.block_until_ready(swish(x))
    assert y.shape == x.shape and y.dtype == x.dtype
    assert jnp.allclose(y, x * jax.nn.sigmoid(x), atol=1e-5, rtol=1e-5)

    # Ragged element count -> exercises the pad + slice fallback path.
    x2 = jax.random.normal(k1, (3, 5, 7), dtype=jnp.float32)
    y2 = jax.block_until_ready(swish(x2))
    assert y2.shape == x2.shape and y2.dtype == x2.dtype
    assert jnp.allclose(y2, x2 * jax.nn.sigmoid(x2), atol=1e-5, rtol=1e-5)

    # bf16 input -> exercises dtype-aware (16, 128) sublane alignment.
    x3 = jax.random.normal(k2, (4, 8, 64), dtype=jnp.bfloat16)
    y3 = jax.block_until_ready(swish(x3))
    assert y3.shape == x3.shape and y3.dtype == x3.dtype
    ref3 = (x3.astype(jnp.float32) * jax.nn.sigmoid(x3.astype(jnp.float32))).astype(jnp.bfloat16)
    assert jnp.allclose(y3.astype(jnp.float32), ref3.astype(jnp.float32), atol=2e-2, rtol=2e-2)

    # Aligned but tile-indivisible rows -> zero-copy path, even 2-step grid,
    # masked partial last block.
    x4 = jax.random.normal(k3, (1048, 128), dtype=jnp.float32)
    y4 = jax.block_until_ready(swish(x4))
    assert y4.shape == x4.shape and y4.dtype == x4.dtype
    assert jnp.allclose(y4, x4 * jax.nn.sigmoid(x4), atol=1e-5, rtol=1e-5)

    print("KERNEL_OK")
</pallas_src>

<mosaic_0001>
module attributes {stable_mosaic.version = 11 : i64} {
  func.func @_swish_kernel(%arg0: i32, %arg1: memref<16x128xf32, #tpu.memory_space<vmem>>, %arg2: memref<16x128xf32, #tpu.memory_space<vmem>>) attributes {dimension_semantics = [#tpu.dimension_semantics<parallel>], iteration_bounds = array<i64: 1>, scalar_prefetch = 0 : i64, scratch_operands = 0 : i64, tpu.core_type = #tpu.core_type<tc>, window_params = [{transform_indices = @transform_0, window_bounds = array<i64: 16, 128>}, {transform_indices = @transform_1, window_bounds = array<i64: 16, 128>}]} {
    %c0 = arith.constant 0 : index
    %c0_0 = arith.constant 0 : index
    %0 = vector.load %arg1[%c0, %c0_0] : memref<16x128xf32, #tpu.memory_space<vmem>>, vector<16x128xf32>
    %cst = arith.constant 5.000000e-01 : f32
    %1 = vector.broadcast %cst : f32 to vector<16x128xf32>
    %2 = arith.mulf %1, %0 : vector<16x128xf32>
    %3 = math.tanh %2 : vector<16x128xf32>
    %cst_1 = arith.constant 5.000000e-01 : f32
    %4 = vector.broadcast %cst_1 : f32 to vector<16x128xf32>
    %5 = arith.mulf %4, %3 : vector<16x128xf32>
    %cst_2 = arith.constant 5.000000e-01 : f32
    %6 = vector.broadcast %cst_2 : f32 to vector<16x128xf32>
    %7 = arith.addf %5, %6 : vector<16x128xf32>
    %8 = arith.mulf %0, %7 : vector<16x128xf32>
    %c0_3 = arith.constant 0 : index
    %c0_4 = arith.constant 0 : index
    %9 = vector.load %arg2[%c0_3, %c0_4] : memref<16x128xf32, #tpu.memory_space<vmem>>, vector<16x128xf32>
    tpu.vector_store %arg2[%c0_3, %c0_4], %8 {strides = array<i32>} : memref<16x128xf32, #tpu.memory_space<vmem>>, vector<16x128xf32>,
    return
  }
  func.func @transform_0(%arg0: i32) -> (i32, i32) {
    %c0_i32 = arith.constant 0 : i32
    %c0_i32_0 = arith.constant 0 : i32
    return %arg0, %c0_i32 : i32, i32
  }
  func.func @transform_1(%arg0: i32) -> (i32, i32) {
    %c0_i32 = arith.constant 0 : i32
    %c0_i32_0 = arith.constant 0 : i32
    return %arg0, %c0_i32 : i32, i32
  }
}

</mosaic_0001>

<llo_original>
// kernel: tpu_custom_call.1
$region0: #{tpu_custom_call.1}
  #allocation0 [shape = 'u32[]', space=smem, size = 0x4, offset = 0x4, fixed_abs, tag = 'smem constant byte address 0x4 - core index']
  #allocation1 [shape = 'u32[144,128]{1,0:T(1,128)}', space=vmem, size = 0x12000, scoped, tag = 'internal scratch']
  %s0 = inlined_call_operand.hbm [shape: f32[16,128], index: 0, kind: input, shape index: {}]
  %s1 = inlined_call_operand.hbm [shape: f32[16,128], index: 1, kind: output, shape index: {}]
  %s2 = sld [smem:[#allocation0]]
  $region18: #{tpu_custom_call.1} parent=0
    _
  %s4 = ssub.s32 1, %s2
  %s5 = scalar_select 0, %s4, %s2
  $region1: #{tpu_custom_call.1} parent=0
    #allocation2 [shape = 'u8[8192]{0}', space=vmem, size = 0x2000, scoped, tag = 'input window, operand 0, single buffered']
    #allocation3 [shape = 's32[1]{0}', space=sflag, size = 0x4, scoped, tag = 'scoped memory for tpu_custom_call.1']
    #allocation4 [shape = 's32[1]{0}', space=sflag, size = 0x4, scoped, tag = 'scoped memory for tpu_custom_call.1']
    #allocation5 [shape = 'u8[8192]{0}', space=vmem, size = 0x2000, scoped, tag = 'output window, operand 0, single buffered']
    %6 = vsyncpa [#allocation3], 0
    %7 = vsyncpa [#allocation4], 0
    // Predicated region
    $region2: #{tpu_custom_call.1} parent=1 // pred_check
      _
    $region3: #{tpu_custom_call.1} parent=1 // pred_check_branch
      %9 = sbr.rel (0) target = $region5
    $region4: #{tpu_custom_call.1} parent=1 // pred_region
      %s11 = ssub.s32 256, 256
      %12 = vsyncadd [#allocation3], %s11
      %s13 = sshll.u32 [#allocation2], 4
      %s14 = int_to_ptr.vmem [resolvable:$true] %s13
      %19 = dma.hbm_to_vmem [thread:$0]  %s0, 256, %s14, [#allocation3], 128, 128, 8
    $region5: #{tpu_custom_call.1} parent=1 // pred_fallthru
      _
    // Predicated region
    $region6: #{tpu_custom_call.1} parent=1 // pred_check
      _
    $region7: #{tpu_custom_call.1} parent=1 // pred_check_branch
      %21 = sbr.rel (0) target = $region9
    $region8: #{tpu_custom_call.1} parent=1 // pred_region
      %22 = dma.done [#allocation3], 256
    $region9: #{tpu_custom_call.1} parent=1 // pred_fallthru
      _
    %v23 = vld [vmem:[#allocation2] sm:$0xff]
    %v24 = vld [vmem:[#allocation2 + $0x8] sm:$0xff]
    %v25 = vmul.f32 %v23, 0.5
    %v26 = vmul.f32 %v24, 0.5
    %v27 = vtanh.pop %v25
    %v28 = vtanh.pop %v26
    %v29 = vmul.f32 %v27, 0.5
    %v30 = vmul.f32 %v28, 0.5
    %v31 = vadd.f32 %v29, 0.5
    %v32 = vadd.f32 %v30, 0.5
    %v33 = vmul.f32 %v23, %v31
    %v34 = vmul.f32 %v24, %v32
    %35 = vst [vmem:[#allocation5] sm:$0xff] %v33
    %36 = vst [vmem:[#allocation5 + $0x8] sm:$0xff] %v34
    // Predicated region
    $region10: #{tpu_custom_call.1} parent=1 // pred_check
      _
    $region11: #{tpu_custom_call.1} parent=1 // pred_check_branch
      %38 = sbr.rel (0) target = $region13
    $region12: #{tpu_custom_call.1} parent=1 // pred_region
      %s40 = ssub.s32 256, 256
      %41 = vsyncadd [#allocation4], %s40
      %s42 = sshll.u32 [#allocation5], 4
      %s43 = int_to_ptr.vmem [resolvable:$true] %s42
      %48 = dma.vmem_to_hbm [thread:$0]  %s43, 256, %s1, [#allocation4], 128, 128, 8
    $region13: #{tpu_custom_call.1} parent=1 // pred_fallthru
      _
    // Predicated region
    $region14: #{tpu_custom_call.1} parent=1 // pred_check
      _
    $region15: #{tpu_custom_call.1} parent=1 // pred_check_branch
      %50 = sbr.rel (0) target = $region17
    $region16: #{tpu_custom_call.1} parent=1 // pred_region
      %51 = dma.done [#allocation4], 256
    $region17: #{tpu_custom_call.1} parent=1 // pred_fallthru
      _
    %52 = vsyncpa [#allocation3], 1
    %53 = vsyncpa [#allocation4], 1

</llo_original>
